<compile_context>
chip_gen: v7x
topology: tpu7x:2x2x1
jax: 0.10.0
libtpu: 0.0.40
codegen_flags: <defaults>
</compile_context>

<pallas_src>
import math

import jax
import jax.numpy as jnp
from jax.experimental import pallas as pl
from jax.experimental.pallas import tpu as pltpu

EPSILON_FP16 = 1e-05
_LOG_EPS = math.log(EPSILON_FP16)          # log(eps)
_LOG_1M_EPS = math.log1p(-EPSILON_FP16)    # log(1 - eps)


def _lsoft_sum_kernel(beta_ref, nvalid_ref, x_ref, y_ref, out_ref):
    """Partial sum of LSoft-BCE over one (TM, C) tile of logits/labels.

    beta_ref   : SMEM f32[1]      -- LSoft beta
    nvalid_ref : SMEM i32[1]      -- number of valid flattened elements
    x_ref      : VMEM (TM, C)     -- raw logits (native dtype, pre-sigmoid)
    y_ref      : VMEM (TM, C)     -- labels (native dtype)
    out_ref    : VMEM (1, 8, 128) -- this tile's partial sum, splat-stored
    """
    beta = beta_ref[0]
    n_valid = nvalid_ref[0]

    x = x_ref[...].astype(jnp.float32)
    y = y_ref[...].astype(jnp.float32)
    tm, c = x.shape

    # Validity mask over the flattened element index: handles the ragged tail
    # tile of the cdiv grid and the intra-row padding of the primary call.
    row = pl.program_id(0) * tm + jax.lax.broadcasted_iota(jnp.int32, (tm, c), 0)
    col = jax.lax.broadcasted_iota(jnp.int32, (tm, c), 1)
    valid = row * c + col < n_valid

    # p = clamp(sigmoid(x), eps, 1-eps). log(1-p) is derived from log(p) via
    # log(1-sigmoid(x)) = log(sigmoid(x)) - x (saves one EUP log / element);
    # the epsilon clamp is applied equivalently (monotone log) in log space.
    p_raw = jax.nn.sigmoid(x)
    lp_raw = jnp.log(p_raw)                               # log(sigmoid(x))
    l1mp_raw = jnp.where(p_raw == 0.0, 0.0, lp_raw - x)   # log(1 - sigmoid(x))
    p = jnp.clip(p_raw, EPSILON_FP16, 1.0 - EPSILON_FP16)
    lp = jnp.clip(lp_raw, _LOG_EPS, _LOG_1M_EPS)
    l1mp = jnp.clip(l1mp_raw, _LOG_EPS, _LOG_1M_EPS)

    # LSoftLoss: soft target, elementwise BCE, masked tile sum.
    t = (beta * y + (1.0 - beta) * p) * y
    bce = -(t * lp + (1.0 - t) * l1mp)
    bce = jnp.where(valid, bce, 0.0)

    tile_sum = jnp.sum(bce, axis=1, keepdims=True)        # lane reduce   -> (TM,1)
    tile_sum = jnp.sum(tile_sum, axis=0, keepdims=True)   # sublane       -> (1,1)
    out_ref[...] = jnp.broadcast_to(tile_sum[None], out_ref.shape)


def _choose_tm(n_rows, n_cols):
    """Row-tile giving ~1 MiB of f32 work per block (sublane/packing friendly)."""
    rows = max(8, ((1 << 20) // (n_cols * 4)) // 32 * 32)
    return n_rows if n_rows <= rows else rows


def _lsoft_sum(x2d, y2d, beta, n_valid):
    """Sum of LSoft-BCE over the first `n_valid` flattened elements of x2d/y2d."""
    n_rows, n_cols = x2d.shape
    tm = _choose_tm(n_rows, n_cols)
    num_tiles = -(-n_rows // tm)          # cdiv; ragged tail masked in-kernel

    partials = pl.pallas_call(
        _lsoft_sum_kernel,
        out_shape=jax.ShapeDtypeStruct((num_tiles, 8, 128), jnp.float32),
        grid_spec=pltpu.PrefetchScalarGridSpec(
            num_scalar_prefetch=0,
            grid=(num_tiles,),
            in_specs=[
                pl.BlockSpec(memory_space=pltpu.MemorySpace.SMEM),   # beta
                pl.BlockSpec(memory_space=pltpu.MemorySpace.SMEM),   # n_valid
                pl.BlockSpec((tm, n_cols), lambda i: (i, 0)),        # logits
                pl.BlockSpec((tm, n_cols), lambda i: (i, 0)),        # labels
            ],
            out_specs=pl.BlockSpec((1, 8, 128), lambda i: (i, 0, 0)),
        ),
        compiler_params=pltpu.CompilerParams(
            dimension_semantics=("parallel",),
            vmem_limit_bytes=32 * 1024 * 1024),
    )(jnp.array([beta], jnp.float32),
      jnp.array([n_valid], jnp.int32),
      x2d, y2d)
    return jnp.sum(partials[:, 0, 0])


def bce_controlled_loss(y_pred, target, beta, primary_beta,
                        primary_loss_factor=1.0):
    """JAX/Pallas equivalent of BCEControlledLoss.forward (logits in, loss out)."""
    y_true, target_primary = target
    bs, s, o = y_true.shape
    n = bs * s

    logits = y_pred.reshape(n, o)     # native dtype; kernel upcasts to f32
    labels = y_true.reshape(n, o)

    # Pack k rows per lane row when the (free) reshape makes the last dim a
    # multiple of 128; otherwise keep the raw (n, o) layout.
    k = 128 // math.gcd(o, 128)
    if k > 1 and n % k == 0:
        x2d = logits.reshape(n // k, k * o)
        y2d = labels.reshape(n // k, k * o)
    else:
        # TODO(synk): lane-sparse layout when o is not 128-friendly and n % k != 0.
        x2d, y2d = logits, labels

    bce_sum = _lsoft_sum(x2d, y2d, beta, n * o)
    bce_mean = bce_sum / float(n * o)      # == mean over rows of per-row means

    if target_primary is None:
        return bce_mean, {'primary_loss': jnp.zeros((), jnp.float32),
                          'bce_loss': bce_mean}

    pidx = jnp.asarray(target_primary).reshape(n, -1)[:, 0].astype(jnp.int32)
    pidx = jnp.clip(pidx, 0, o - 1)        # guard OOB (JAX-style clamping)
    x_prim = jnp.take_along_axis(logits, pidx[:, None], axis=1)[:, 0]

    rp = -(-n // 128)                       # lane-dense (rp, 128) layout
    x_prim = jnp.pad(x_prim, (0, rp * 128 - n)).reshape(rp, 128)
    ones = jnp.ones((rp, 128), x_prim.dtype)
    # LSoft with y_true == 1 and beta = primary_beta; padded tail is masked.
    prim_sum = _lsoft_sum(x_prim, ones, primary_beta, n)
    prim_mean = prim_sum * (primary_loss_factor / n)

    loss = bce_mean + prim_mean
    return loss, {'primary_loss': prim_mean, 'bce_loss': bce_mean}


# ----------------------------- reference & test -----------------------------

def _reference(y_pred, y_true, target_primary, beta, primary_beta, factor):
    """Pure-JAX reference, faithful to the torch module."""
    bs, s, o = y_true.shape
    n = bs * s
    p = jnp.clip(jax.nn.sigmoid(y_pred.astype(jnp.float32)),
                 EPSILON_FP16, 1.0 - EPSILON_FP16).reshape(n, o)
    y = y_true.reshape(n, o).astype(jnp.float32)
    t = (beta * y + (1.0 - beta) * p) * y
    bce = -(t * jnp.log(p) + (1.0 - t) * jnp.log(1.0 - p))
    bce_row = bce.mean(axis=1)
    if target_primary is None:
        return bce_row.mean(), jnp.zeros(()), bce_row.mean()
    idx = jnp.asarray(target_primary).reshape(n, -1)[:, 0]
    p_prim = p[jnp.arange(n), idx]
    t_prim = primary_beta + (1.0 - primary_beta) * p_prim
    prim = -(t_prim * jnp.log(p_prim)
             + (1.0 - t_prim) * jnp.log(1.0 - p_prim)) * factor
    loss = (bce_row + prim).mean()
    return loss, prim.mean(), bce_row.mean()


if __name__ == "__main__":
    def check(bs, s, o, factor, with_primary, key, atol=1e-5, rtol=1e-5):
        k1, k2, k3 = jax.random.split(key, 3)
        y_pred = jax.random.normal(k1, (bs, s, o), jnp.float32)
        y_true = (jax.random.uniform(k2, (bs, s, o)) > 0.5).astype(jnp.float32)
        tp = (jax.random.randint(k3, (bs * s, 1), 0, o, jnp.int32)
              if with_primary else None)
        beta, pbeta = 0.7, 0.9
        loss, logs = bce_controlled_loss(y_pred, (y_true, tp), beta, pbeta,
                                         primary_loss_factor=factor)
        jax.block_until_ready(loss)
        ref_loss, ref_prim, ref_bce = _reference(y_pred, y_true, tp,
                                                 beta, pbeta, factor)
        assert jnp.allclose(loss, ref_loss, atol=atol, rtol=rtol), (loss, ref_loss)
        assert jnp.allclose(logs['bce_loss'], ref_bce, atol=atol, rtol=rtol)
        assert jnp.allclose(logs['primary_loss'], ref_prim, atol=atol, rtol=rtol)

    keys = jax.random.split(jax.random.PRNGKey(0), 4)
    # Small shapes consistent with the module (batch=2, seq=8, classes=32).
    check(2, 8, 32, 0.5, True, keys[0])
    # target_primary=None path (primary kernel skipped entirely).
    check(2, 8, 32, 1.0, False, keys[1])
    # Odd class count -> lane-sparse fallback layout.
    check(2, 8, 33, 1.0, True, keys[2])
    # Larger case -> multi-tile "parallel" grid with a masked partial tail tile.
    check(2, 1032, 128, 0.5, True, keys[3], atol=1e-5, rtol=2e-4)

    print("KERNEL_OK")
</pallas_src>

<mosaic_0001>
module attributes {stable_mosaic.version = 11 : i64} {
  func.func @_lsoft_sum_kernel(%arg0: i32, %arg1: memref<1xf32, #tpu.memory_space<smem>>, %arg2: memref<1xi32, #tpu.memory_space<smem>>, %arg3: memref<4x128xf32, #tpu.memory_space<vmem>>, %arg4: memref<4x128xf32, #tpu.memory_space<vmem>>, %arg5: memref<1x8x128xf32, #tpu.memory_space<vmem>>) attributes {dimension_semantics = [#tpu.dimension_semantics<parallel>], iteration_bounds = array<i64: 1>, scalar_prefetch = 0 : i64, scratch_operands = 0 : i64, tpu.core_type = #tpu.core_type<tc>, window_params = [{transform_indices = @transform_0, window_bounds = array<i64: 1>}, {transform_indices = @transform_1, window_bounds = array<i64: 1>}, {transform_indices = @transform_2, window_bounds = array<i64: 4, 128>}, {transform_indices = @transform_3, window_bounds = array<i64: 4, 128>}, {transform_indices = @transform_4, window_bounds = array<i64: 1, 8, 128>}]} {
    %c0 = arith.constant 0 : index
    %0 = memref.load %arg1[%c0] : memref<1xf32, #tpu.memory_space<smem>>
    %c0_0 = arith.constant 0 : index
    %1 = memref.load %arg2[%c0_0] : memref<1xi32, #tpu.memory_space<smem>>
    %c0_1 = arith.constant 0 : index
    %c0_2 = arith.constant 0 : index
    %2 = vector.load %arg3[%c0_1, %c0_2] : memref<4x128xf32, #tpu.memory_space<vmem>>, vector<4x128xf32>
    %c0_3 = arith.constant 0 : index
    %c0_4 = arith.constant 0 : index
    %3 = vector.load %arg4[%c0_3, %c0_4] : memref<4x128xf32, #tpu.memory_space<vmem>>, vector<4x128xf32>
    %c4_i32 = arith.constant 4 : i32
    %4 = arith.muli %arg0, %c4_i32 : i32
    %5 = tpu.iota {dimensions = array<i32: 0>} : vector<4x128xi32>
    %6 = vector.broadcast %4 : i32 to vector<4x128xi32>
    %7 = arith.addi %6, %5 : vector<4x128xi32>
    %8 = tpu.iota {dimensions = array<i32: 1>} : vector<4x128xi32>
    %c128_i32 = arith.constant 128 : i32
    %9 = vector.broadcast %c128_i32 : i32 to vector<4x128xi32>
    %10 = arith.muli %7, %9 : vector<4x128xi32>
    %11 = arith.addi %10, %8 : vector<4x128xi32>
    %12 = vector.broadcast %1 : i32 to vector<4x128xi32>
    %13 = arith.cmpi slt, %11, %12 : vector<4x128xi32>
    %14 = arith.negf %2 : vector<4x128xf32>
    %15 = math.exp %14 : vector<4x128xf32>
    %cst = arith.constant 1.000000e+00 : f32
    %16 = vector.broadcast %cst : f32 to vector<4x128xf32>
    %17 = arith.addf %16, %15 : vector<4x128xf32>
    %18 = arith.divf %16, %17 : vector<4x128xf32>
    %19 = math.log %18 : vector<4x128xf32>
    %cst_5 = arith.constant 0.000000e+00 : f32
    %20 = vector.broadcast %cst_5 : f32 to vector<4x128xf32>
    %21 = arith.cmpf oeq, %18, %20 : vector<4x128xf32>
    %22 = arith.subf %19, %2 : vector<4x128xf32>
    %cst_6 = arith.constant 0.000000e+00 : f32
    %23 = vector.broadcast %cst_6 : f32 to vector<4x128xf32>
    %24 = arith.select %21, %23, %22 : vector<4x128xi1>, vector<4x128xf32>
    %cst_7 = arith.constant 9.99999974E-6 : f32
    %cst_8 = arith.constant 0.999989986 : f32
    %25 = vector.broadcast %cst_7 : f32 to vector<4x128xf32>
    %26 = arith.maximumf %25, %18 : vector<4x128xf32>
    %27 = vector.broadcast %cst_8 : f32 to vector<4x128xf32>
    %28 = arith.minimumf %27, %26 : vector<4x128xf32>
    %cst_9 = arith.constant -11.5129251 : f32
    %cst_10 = arith.constant -1.00000498E-5 : f32
    %29 = vector.broadcast %cst_9 : f32 to vector<4x128xf32>
    %30 = arith.maximumf %29, %19 : vector<4x128xf32>
    %31 = vector.broadcast %cst_10 : f32 to vector<4x128xf32>
    %32 = arith.minimumf %31, %30 : vector<4x128xf32>
    %cst_11 = arith.constant -11.5129251 : f32
    %cst_12 = arith.constant -1.00000498E-5 : f32
    %33 = vector.broadcast %cst_11 : f32 to vector<4x128xf32>
    %34 = arith.maximumf %33, %24 : vector<4x128xf32>
    %35 = vector.broadcast %cst_12 : f32 to vector<4x128xf32>
    %36 = arith.minimumf %35, %34 : vector<4x128xf32>
    %37 = vector.broadcast %0 : f32 to vector<4x128xf32>
    %38 = arith.mulf %37, %3 : vector<4x128xf32>
    %cst_13 = arith.constant 1.000000e+00 : f32
    %39 = arith.subf %cst_13, %0 : f32
    %40 = vector.broadcast %39 : f32 to vector<4x128xf32>
    %41 = arith.mulf %40, %28 : vector<4x128xf32>
    %42 = arith.addf %38, %41 : vector<4x128xf32>
    %43 = arith.mulf %42, %3 : vector<4x128xf32>
    %44 = arith.mulf %43, %32 : vector<4x128xf32>
    %cst_14 = arith.constant 1.000000e+00 : f32
    %45 = vector.broadcast %cst_14 : f32 to vector<4x128xf32>
    %46 = arith.subf %45, %43 : vector<4x128xf32>
    %47 = arith.mulf %46, %36 : vector<4x128xf32>
    %48 = arith.addf %44, %47 : vector<4x128xf32>
    %cst_15 = arith.constant 0.000000e+00 : f32
    %49 = vector.broadcast %cst_15 : f32 to vector<4x128xf32>
    %50 = arith.subf %49, %48 : vector<4x128xf32>
    %cst_16 = arith.constant 0.000000e+00 : f32
    %51 = vector.broadcast %cst_16 : f32 to vector<4x128xf32>
    %52 = arith.select %13, %50, %51 : vector<4x128xi1>, vector<4x128xf32>
    %cst_17 = arith.constant dense<0.000000e+00> : vector<4xf32>
    %53 = vector.multi_reduction <add>, %52, %cst_17 [1] : vector<4x128xf32> to vector<4xf32>
    %54 = vector.shape_cast %53 : vector<4xf32> to vector<4x1xf32>
    %cst_18 = arith.constant dense<0.000000e+00> : vector<1xf32>
    %55 = vector.multi_reduction <add>, %54, %cst_18 [0] : vector<4x1xf32> to vector<1xf32>
    %56 = vector.shape_cast %55 : vector<1xf32> to vector<1x1xf32>
    %57 = vector.shape_cast %56 : vector<1x1xf32> to vector<1x1x1xf32>
    %58 = vector.shape_cast %57 : vector<1x1x1xf32> to vector<1x1x1xf32>
    %59 = vector.broadcast %58 : vector<1x1x1xf32> to vector<1x8x128xf32>
    %c0_19 = arith.constant 0 : index
    %c0_20 = arith.constant 0 : index
    %c0_21 = arith.constant 0 : index
    %60 = vector.load %arg5[%c0_19, %c0_20, %c0_21] : memref<1x8x128xf32, #tpu.memory_space<vmem>>, vector<1x8x128xf32>
    tpu.vector_store %arg5[%c0_19, %c0_20, %c0_21], %59 {strides = array<i32>} : memref<1x8x128xf32, #tpu.memory_space<vmem>>, vector<1x8x128xf32>,
    return
  }
  func.func @transform_0(%arg0: i32) -> i32 {
    %c0_i32 = arith.constant 0 : i32
    %c0_i32_0 = arith.constant 0 : i32
    return %c0_i32 : i32
  }
  func.func @transform_1(%arg0: i32) -> i32 {
    %c0_i32 = arith.constant 0 : i32
    %c0_i32_0 = arith.constant 0 : i32
    return %c0_i32 : i32
  }
  func.func @transform_2(%arg0: i32) -> (i32, i32) {
    %c0_i32 = arith.constant 0 : i32
    %c0_i32_0 = arith.constant 0 : i32
    return %arg0, %c0_i32 : i32, i32
  }
  func.func @transform_3(%arg0: i32) -> (i32, i32) {
    %c0_i32 = arith.constant 0 : i32
    %c0_i32_0 = arith.constant 0 : i32
    return %arg0, %c0_i32 : i32, i32
  }
  func.func @transform_4(%arg0: i32) -> (i32, i32, i32) {
    %c0_i32 = arith.constant 0 : i32
    %c0_i32_0 = arith.constant 0 : i32
    %c0_i32_1 = arith.constant 0 : i32
    return %arg0, %c0_i32, %c0_i32_0 : i32, i32, i32
  }
}

</mosaic_0001>

<llo_original>
// kernel: tpu_custom_call.1
$region0: #{tpu_custom_call.1}
  #allocation0 [shape = 'u32[]', space=smem, size = 0x4, offset = 0x4, fixed_abs, tag = 'smem constant byte address 0x4 - core index']
  #allocation1 [shape = 'u32[144,128]{1,0:T(1,128)}', space=vmem, size = 0x12000, scoped, tag = 'internal scratch']
  #allocation2 [shape = 'f32[1]{0:T(128)S(6)}', space=smem, size = 0x200, scoped, tag = 'scoped memory for tpu_custom_call.1']
  #allocation3 [shape = 's32[1]{0:T(128)S(6)}', space=smem, size = 0x200, scoped, tag = 'scoped memory for tpu_custom_call.1']
  %s0 = inlined_call_operand.<no memory space> [shape: f32[1], index: 0, kind: input, shape index: {}]
  %s1 = inlined_call_operand.<no memory space> [shape: s32[1], index: 1, kind: input, shape index: {}]
  %s2 = inlined_call_operand.vmem [shape: f32[4,128], index: 2, kind: input, shape index: {}]
  %s3 = inlined_call_operand.vmem [shape: f32[4,128], index: 3, kind: input, shape index: {}]
  %s4 = inlined_call_operand.hbm [shape: f32[1,8,128], index: 4, kind: output, shape index: {}]
  %s5 = sld [smem:[#allocation0]]
  $region26: #{tpu_custom_call.1} parent=0
    _
  %s7 = ssub.s32 1, %s5
  %s8 = scalar_select 0, %s7, %s5
  %9 = sst [smem:[#allocation2]] %s0
  %10 = sst [smem:[#allocation3]] %s1
  $region1: #{tpu_custom_call.1} parent=0
    #allocation4 [shape = 'u8[4096]{0}', space=vmem, size = 0x1000, scoped, tag = 'output window, operand 0, single buffered']
    #allocation5 [shape = 's32[1]{0}', space=sflag, size = 0x4, scoped, tag = 'scoped memory for tpu_custom_call.1']
    %11 = vsyncpa [#allocation5], 0
    // Predicated region
    $region2: #{tpu_custom_call.1} parent=1 // pred_check
      _
    $region3: #{tpu_custom_call.1} parent=1 // pred_check_branch
      %13 = sbr.rel (0) target = $region5
    $region4: #{tpu_custom_call.1} parent=1 // pred_region
      _
    $region5: #{tpu_custom_call.1} parent=1 // pred_fallthru
      _
    // Predicated region
    $region6: #{tpu_custom_call.1} parent=1 // pred_check
      _
    $region7: #{tpu_custom_call.1} parent=1 // pred_check_branch
      %15 = sbr.rel (0) target = $region9
    $region8: #{tpu_custom_call.1} parent=1 // pred_region
      _
    $region9: #{tpu_custom_call.1} parent=1 // pred_fallthru
      _
    // Predicated region
    $region10: #{tpu_custom_call.1} parent=1 // pred_check
      _
    $region11: #{tpu_custom_call.1} parent=1 // pred_check_branch
      %17 = sbr.rel (0) target = $region13
    $region12: #{tpu_custom_call.1} parent=1 // pred_region
      _
    $region13: #{tpu_custom_call.1} parent=1 // pred_fallthru
      _
    // Predicated region
    $region14: #{tpu_custom_call.1} parent=1 // pred_check
      _
    $region15: #{tpu_custom_call.1} parent=1 // pred_check_branch
      %19 = sbr.rel (0) target = $region17
    $region16: #{tpu_custom_call.1} parent=1 // pred_region
      _
    $region17: #{tpu_custom_call.1} parent=1 // pred_fallthru
      _
    %s20 = sld [smem:[#allocation2]]
    %s21 = sld [smem:[#allocation3]]
    %v22 = vld [vmem:[%s2] sm:$0xf]
    %v23 = vld [vmem:[%s3] sm:$0xf]
    %s24 = smul.u32 0, 4
    %v25 = vlaneseq
    %v26 = vshrl.u32 %v25, 7
    %v27 = vstv %s24
    %v28 = vadd.s32 %v27, %v26
    %v29 = vlaneseq
    %v30 = vand.u32 %v29, 127
    %v31 = vmul.u32 %v28, 128
    %v32 = vadd.s32 %v31, %v30
    %v33 = vstv %s21
    %vm34 = vcmp.lt.s32.totalorder %v32, %v33
    %v35 = vxor.u32 %v22, 2147483648
    %v36 = vmul.f32 %v35, 1.442695
    %v37 = vpow.pop %v36
    %v38 = vadd.f32 %v37, 1.0
    %v39 = vrcp.pop %v38
    %v40 = vmul.f32 1.0, %v39
    %v41 = vlog2.pop %v40
    %v42 = vmul.f32 %v41, 0.6931472
    %vm43 = vcmp.eq.f32.partialorder %v40, 0.0
    %v44 = vsub.f32 %v42, %v22
    %v45 = vsel %vm43, 0.0, %v44
    %v46 = vmax.f32 %v40, 1e-05
    %v47 = vmin.f32 %v46, 0.99999
    %v48 = vmax.f32 %v42, -11.512925
    %v49 = vmin.f32 %v48, -1.000005e-05
    %v50 = vmax.f32 %v45, -11.512925
    %v51 = vmin.f32 %v50, -1.000005e-05
    %v52 = vstv %s20
    %v53 = vmul.f32 %v52, %v23
    %s54 = ssub.f32 1.0, %s20
    %v55 = vstv %s54
    %v56 = vmul.f32 %v55, %v47
    %v57 = vadd.f32 %v53, %v56
    %v58 = vmul.f32 %v57, %v23
    %v59 = vmul.f32 %v58, %v49
    %v60 = vsub.f32 1.0, %v58
    %v61 = vmul.f32 %v60, %v51
    %v62 = vadd.f32 %v59, %v61
    %v63 = vsub.f32 0.0, %v62
    %v64 = vsel %vm34, %v63, 0.0
    %vm65 = vcmask 1043456
    %v66 = vsel %vm65, %v64, 0.0
    %67 = vadd.xlane.f32.xlu0 %v66
    %v68 = vpop.xlane.xlu0 %67
    %v69 = vsel %vm65, %v68, 0.0
    %v70 = vrot.slane %v69, 4
    %v71 = vadd.f32 %v69, %v70
    %v72 = vrot.slane %v71, 2
    %v73 = vadd.f32 %v71, %v72
    %v74 = vrot.slane %v73, 1
    %v75 = vadd.f32 %v73, %v74
    %76 = vst [vmem:[#allocation4] sm:$0xff] %v75
    // Predicated region
    $region18: #{tpu_custom_call.1} parent=1 // pred_check
      _
    $region19: #{tpu_custom_call.1} parent=1 // pred_check_branch
      %78 = sbr.rel (0) target = $region21
    $region20: #{tpu_custom_call.1} parent=1 // pred_region
      %s80 = ssub.s32 128, 128
      %81 = vsyncadd [#allocation5], %s80
      %s83 = sshll.u32 [#allocation4], 4
      %s84 = int_to_ptr.vmem [resolvable:$true] %s83
      %86 = dma.vmem_to_hbm [thread:$0]  %s84, 128, %s4, [#allocation5]
    $region21: #{tpu_custom_call.1} parent=1 // pred_fallthru
      _
    // Predicated region
    $region22: #{tpu_custom_call.1} parent=1 // pred_check
      _
    $region23: #{tpu_custom_call.1} parent=1 // pred_check_branch
      %88 = sbr.rel (0) target = $region25
    $region24: #{tpu_custom_call.1} parent=1 // pred_region
      %89 = dma.done [#allocation5], 128
    $region25: #{tpu_custom_call.1} parent=1 // pred_fallthru
      _
    %90 = vsyncpa [#allocation5], 1

</llo_original>
